<compile_context>
chip_gen: v7x
topology: tpu7x:2x2x1
jax: 0.10.0
libtpu: 0.0.40
codegen_flags: <defaults>
</compile_context>

<pallas_src>
import jax
import jax.numpy as jnp
from jax.experimental import pallas as pl
from jax.experimental.pallas import tpu as pltpu

_MIB = 1024 * 1024


# ----------------------------------------------------------------------------
# Kernel
# ----------------------------------------------------------------------------
def autoencoder_kernel(x_ref,
                       w1_ref, b1_ref,     # encoder L1            : (in, in//2), (1, in//2)
                       w23_ref, b23_ref,   # folded enc-L2 @ dec-L1: (in//2, in//2), (1, in//2)
                       w4_ref, b4_ref,     # decoder L2            : (in//2, in), (1, in)
                       o_ref):
    mxu_dt = w1_ref.dtype                  # bf16: native MXU input dtype
    # Cast the f32 input tile to bf16 in-kernel (VPU) -- avoids a separate
    # XLA cast pass over HBM. No-op if the caller already supplied bf16.
    x = x_ref[...].astype(mxu_dt)

    # encoder layer 1 + ReLU (f32 accumulation, f32 bias/ReLU -> works on v5e VPU)
    h1 = jnp.dot(x, w1_ref[...], preferred_element_type=jnp.float32) + b1_ref[...]
    h1 = jnp.maximum(h1, 0.0)

    # encoder layer 2 and decoder layer 1 folded into one (in//2 x in//2) matmul
    h2 = jnp.dot(h1.astype(mxu_dt), w23_ref[...],
                 preferred_element_type=jnp.float32) + b23_ref[...]
    h2 = jnp.maximum(h2, 0.0)

    # decoder layer 2
    y = jnp.dot(h2.astype(mxu_dt), w4_ref[...],
                preferred_element_type=jnp.float32) + b4_ref[...]

    o_ref[...] = y.astype(o_ref.dtype)


# ----------------------------------------------------------------------------
# Tiling helpers
# ----------------------------------------------------------------------------
def _round_up(x, m):
    return ((x + m - 1) // m) * m


def _vmem_budget_bytes():
    """Generation-aware per-TensorCore VMEM budget, leaving compiler headroom."""
    try:
        cap = int(pltpu.get_tpu_info().vmem_capacity_bytes)
    except Exception:                       # non-TPU trace / very old runtime
        cap = 64 * _MIB                     # conservative: v7x per-TC size
    if cap >= 96 * _MIB:                    # v5e / v6e (128 MiB parts)
        return min(cap - 28 * _MIB, 100 * _MIB)
    return max(cap - 12 * _MIB, 16 * _MIB)  # v7x: ~52 of 64 MiB


def _choose_block_batch(batch, in_p, hidden, vmem_budget,
                        in_bytes, out_bytes, io_bytes):
    """Batch tile from the VMEM budget: as large as fits (amortizes the
    ~0.35us/step overhead), but >=2 (preferably even) grid steps for megacore."""
    # Resident weights/biases, assuming default double-buffering of every input.
    w_bytes = 2 * ((in_p * hidden + hidden * hidden + hidden * in_p) * io_bytes
                   + (2 * hidden + in_p) * 4)
    per_row = (2 * in_p * in_bytes          # double-buffered x tile
               + 2 * in_p * out_bytes       # double-buffered out tile
               + in_p * io_bytes            # in-kernel bf16 copy of x
               + 4 * (2 * hidden + in_p))   # f32 h1 / h2 / y temporaries
    avail = max(vmem_budget - w_bytes, 16 * per_row)
    bb = int(avail // (2 * per_row))        # 2x headroom (vregs, compiler scratch)
    bb = max(16, min(bb, 4096))
    # Keep >=2 grid steps when the batch allows so ("parallel",) can split the
    # batch axis across v7x's two TensorCores.
    if batch > 16:
        bb = min(bb, _round_up(pl.cdiv(batch, 2), 16))
    bb = max(16, (bb // 16) * 16)           # 16-row alignment (bf16 sublane pairs)
    # Prefer an even step count so no TC idles on a tail step.
    n = pl.cdiv(batch, bb)
    if n > 2 and n % 2 == 1:
        bb_even = max(16, _round_up(pl.cdiv(batch, n + 1), 16))
        if pl.cdiv(batch, bb_even) % 2 == 0:
            bb = bb_even
    return bb


# ----------------------------------------------------------------------------
# Parameter prep / wrapper
# ----------------------------------------------------------------------------
def fold_params(params, io_dtype=jnp.bfloat16):
    """Fold encoder-L2 @ decoder-L1 (exact in f32 -- no nonlinearity between
    them) and cast matmul weights to the MXU input dtype. Biases stay f32."""
    w23 = jnp.dot(params["w2"], params["w3"], preferred_element_type=jnp.float32)
    b23 = jnp.dot(params["b2"], params["w3"],
                  preferred_element_type=jnp.float32) + params["b3"]
    return dict(
        w1=params["w1"].astype(io_dtype), b1=params["b1"].astype(jnp.float32),
        w23=w23.astype(io_dtype),         b23=b23.astype(jnp.float32),
        w4=params["w4"].astype(io_dtype), b4=params["b4"].astype(jnp.float32),
    )


def autoencoder_forward(x, params, *, block_batch=None,
                        io_dtype=jnp.bfloat16, out_dtype=None):
    """Fused autoencoder forward pass as one Pallas kernel.

    x: (B, input_size); params: dict w1..w4 (in,out) and b1..b4 (1,out), f32.
    out_dtype: set to jnp.bfloat16 to halve write-back HBM traffic when the
    consumer tolerates bf16 (default: x.dtype, matching PyTorch semantics).
    """
    B, input_size = x.shape
    hidden = params["w1"].shape[1]
    out_dtype = jnp.dtype(out_dtype) if out_dtype is not None else x.dtype

    fp = fold_params(params, io_dtype=io_dtype)

    # ---- feature-axis padding: keep x / out tiles lane-dense (last dim % 128) ----
    in_p = _round_up(input_size, 128)
    if in_p != input_size:
        pad_f = in_p - input_size
        x = jnp.pad(x, ((0, 0), (0, pad_f)))
        fp = dict(fp,
                  w1=jnp.pad(fp["w1"], ((0, pad_f), (0, 0))),
                  w4=jnp.pad(fp["w4"], ((0, 0), (0, pad_f))),
                  b4=jnp.pad(fp["b4"], ((0, 0), (0, pad_f))))

    in_bytes = x.dtype.itemsize
    io_bytes = jnp.dtype(io_dtype).itemsize
    out_bytes = jnp.dtype(out_dtype).itemsize

    vmem_budget = _vmem_budget_bytes()
    if block_batch is None:
        block_batch = _choose_block_batch(B, in_p, hidden, vmem_budget,
                                          in_bytes, out_bytes, io_bytes)
    block_batch = max(16, (block_batch // 16) * 16)

    n_blocks = pl.cdiv(B, block_batch)
    B_pad = n_blocks * block_batch
    if B_pad != B:
        x = jnp.pad(x, ((0, B_pad - B), (0, 0)))

    # VMEM actually needed by this configuration (double-buffered tiles + weights).
    w_elems = in_p * hidden + hidden * hidden + hidden * in_p
    b_elems = 2 * hidden + in_p
    vmem_est = (2 * (w_elems * io_bytes + b_elems * 4)
                + 2 * block_batch * in_p * (in_bytes + out_bytes)
                + block_batch * (in_p * io_bytes + 4 * (2 * hidden + in_p)))
    vmem_limit = int(min(vmem_budget, max(16 * _MIB, 2 * vmem_est)))

    cost = pl.CostEstimate(
        flops=2 * B_pad * w_elems,
        transcendentals=0,
        bytes_accessed=(B_pad * in_p * (in_bytes + out_bytes)
                        + w_elems * io_bytes + b_elems * 4),
    )

    def wspec(shape):
        return pl.BlockSpec(shape, lambda i: (0, 0))

    out = pl.pallas_call(
        autoencoder_kernel,
        out_shape=jax.ShapeDtypeStruct((B_pad, in_p), out_dtype),
        grid_spec=pltpu.PrefetchScalarGridSpec(
            num_scalar_prefetch=0,
            grid=(n_blocks,),
            in_specs=[
                pl.BlockSpec((block_batch, in_p), lambda i: (i, 0)),   # x
                wspec((in_p, hidden)),   wspec((1, hidden)),           # w1,  b1
                wspec((hidden, hidden)), wspec((1, hidden)),           # w23, b23
                wspec((hidden, in_p)),   wspec((1, in_p)),             # w4,  b4
            ],
            out_specs=pl.BlockSpec((block_batch, in_p), lambda i: (i, 0)),
        ),
        compiler_params=pltpu.CompilerParams(
            dimension_semantics=("parallel",),
            vmem_limit_bytes=vmem_limit),
        cost_estimate=cost,
    )(x, fp["w1"], fp["b1"], fp["w23"], fp["b23"], fp["w4"], fp["b4"])

    if B_pad != B or in_p != input_size:
        out = out[:B, :input_size]
    return out


# ----------------------------------------------------------------------------
# Parameter init / reference
# ----------------------------------------------------------------------------
def init_params(key, input_size, embedding_size):
    """Deterministic init matching the PyTorch module's layer shapes."""
    hidden = input_size // 2
    keys = jax.random.split(key, 8)

    def linear(kw, kb, fan_in, fan_out):
        # uniform(-1/sqrt(fan_in), 1/sqrt(fan_in)) like torch.nn.Linear default
        lim = 1.0 / jnp.sqrt(jnp.float32(fan_in))
        w = jax.random.uniform(kw, (fan_in, fan_out), jnp.float32, -lim, lim)
        b = jax.random.uniform(kb, (1, fan_out), jnp.float32, -lim, lim)
        return w, b

    w1, b1 = linear(keys[0], keys[1], input_size, hidden)
    w2, b2 = linear(keys[2], keys[3], hidden, embedding_size)
    w3, b3 = linear(keys[4], keys[5], embedding_size, hidden)
    w4, b4 = linear(keys[6], keys[7], hidden, input_size)
    return dict(w1=w1, b1=b1, w2=w2, b2=b2, w3=w3, b3=b3, w4=w4, b4=b4)


def reference_forward(x, params, io_dtype=jnp.bfloat16):
    """Pure-JAX reference mirroring the kernel's exact mixed-precision math
    (weight folding + bf16 MXU inputs + f32 accumulation)."""
    fp = fold_params(params, io_dtype=io_dtype)
    c = lambda a: a.astype(io_dtype)
    h = jnp.dot(c(x), fp["w1"], preferred_element_type=jnp.float32) + fp["b1"]
    h = jnp.maximum(h, 0.0)
    h = jnp.dot(c(h), fp["w23"], preferred_element_type=jnp.float32) + fp["b23"]
    h = jnp.maximum(h, 0.0)
    return jnp.dot(c(h), fp["w4"], preferred_element_type=jnp.float32) + fp["b4"]


if __name__ == "__main__":
    key = jax.random.PRNGKey(0)
    k_x, k_p = jax.random.split(key)

    # Small, TPU-friendly demo shapes: input_size=128 keeps x/out lane-dense;
    # batch=256 -> two parallel 128-row grid steps (both v7x TCs busy).
    batch = 256
    input_size = 128          # "number of runs * features per run"
    embedding_size = 32

    x = jax.random.normal(k_x, (batch, input_size), jnp.float32)
    params = init_params(k_p, input_size, embedding_size)

    out = autoencoder_forward(x, params)        # f32 output, PyTorch semantics
    out = jax.block_until_ready(out)

    ref = reference_forward(x, params)
    assert out.shape == (batch, input_size)
    assert out.dtype == x.dtype
    assert jnp.allclose(out.astype(jnp.float32), ref, atol=2e-3, rtol=2e-3), \
        "mismatch vs reference"

    print("KERNEL_OK")
</pallas_src>

<mosaic_0001>
module attributes {stable_mosaic.version = 11 : i64} {
  func.func @autoencoder_kernel(%arg0: i32, %arg1: memref<128x128xf32, #tpu.memory_space<vmem>>, %arg2: memref<128x64xbf16, #tpu.memory_space<vmem>>, %arg3: memref<1x64xf32, #tpu.memory_space<vmem>>, %arg4: memref<64x64xbf16, #tpu.memory_space<vmem>>, %arg5: memref<1x64xf32, #tpu.memory_space<vmem>>, %arg6: memref<64x128xbf16, #tpu.memory_space<vmem>>, %arg7: memref<1x128xf32, #tpu.memory_space<vmem>>, %arg8: memref<128x128xf32, #tpu.memory_space<vmem>>) attributes {dimension_semantics = [#tpu.dimension_semantics<parallel>], iteration_bounds = array<i64: 2>, scalar_prefetch = 0 : i64, scratch_operands = 0 : i64, tpu.core_type = #tpu.core_type<tc>, window_params = [{transform_indices = @transform_0, window_bounds = array<i64: 128, 128>}, {pipeline_mode = #tpu.pipeline_mode<synchronous>, transform_indices = @transform_1, window_bounds = array<i64: 128, 64>}, {pipeline_mode = #tpu.pipeline_mode<synchronous>, transform_indices = @transform_2, window_bounds = array<i64: 1, 64>}, {pipeline_mode = #tpu.pipeline_mode<synchronous>, transform_indices = @transform_3, window_bounds = array<i64: 64, 64>}, {pipeline_mode = #tpu.pipeline_mode<synchronous>, transform_indices = @transform_4, window_bounds = array<i64: 1, 64>}, {pipeline_mode = #tpu.pipeline_mode<synchronous>, transform_indices = @transform_5, window_bounds = array<i64: 64, 128>}, {pipeline_mode = #tpu.pipeline_mode<synchronous>, transform_indices = @transform_6, window_bounds = array<i64: 1, 128>}, {transform_indices = @transform_7, window_bounds = array<i64: 128, 128>}]} {
    %c0 = arith.constant 0 : index
    %c0_0 = arith.constant 0 : index
    %0 = vector.load %arg1[%c0, %c0_0] : memref<128x128xf32, #tpu.memory_space<vmem>>, vector<128x128xf32>
    %1 = arith.truncf %0 : vector<128x128xf32> to vector<128x128xbf16>
    %c0_1 = arith.constant 0 : index
    %c0_2 = arith.constant 0 : index
    %2 = vector.load %arg2[%c0_1, %c0_2] : memref<128x64xbf16, #tpu.memory_space<vmem>>, vector<128x64xbf16>
    %cst = arith.constant dense<0.000000e+00> : vector<128x64xf32>
    %3 = tpu.matmul %1, %2, %cst {dimension_numbers = #tpu.dot_dimension_numbers<[1], [0], [0], [1], [0, 0, 1, 1], [], []>} : vector<128x128xbf16>, vector<128x64xbf16>, vector<128x64xf32> -> vector<128x64xf32>
    %c0_3 = arith.constant 0 : index
    %c0_4 = arith.constant 0 : index
    %4 = vector.load %arg3[%c0_3, %c0_4] : memref<1x64xf32, #tpu.memory_space<vmem>>, vector<1x64xf32>
    %5 = vector.broadcast %4 : vector<1x64xf32> to vector<128x64xf32>
    %6 = arith.addf %3, %5 : vector<128x64xf32>
    %cst_5 = arith.constant 0.000000e+00 : f32
    %7 = vector.broadcast %cst_5 : f32 to vector<128x64xf32>
    %8 = arith.maximumf %6, %7 : vector<128x64xf32>
    %9 = arith.truncf %8 : vector<128x64xf32> to vector<128x64xbf16>
    %c0_6 = arith.constant 0 : index
    %c0_7 = arith.constant 0 : index
    %10 = vector.load %arg4[%c0_6, %c0_7] : memref<64x64xbf16, #tpu.memory_space<vmem>>, vector<64x64xbf16>
    %cst_8 = arith.constant dense<0.000000e+00> : vector<128x64xf32>
    %11 = tpu.matmul %9, %10, %cst_8 {dimension_numbers = #tpu.dot_dimension_numbers<[1], [0], [0], [1], [0, 0, 1, 1], [], []>} : vector<128x64xbf16>, vector<64x64xbf16>, vector<128x64xf32> -> vector<128x64xf32>
    %c0_9 = arith.constant 0 : index
    %c0_10 = arith.constant 0 : index
    %12 = vector.load %arg5[%c0_9, %c0_10] : memref<1x64xf32, #tpu.memory_space<vmem>>, vector<1x64xf32>
    %13 = vector.broadcast %12 : vector<1x64xf32> to vector<128x64xf32>
    %14 = arith.addf %11, %13 : vector<128x64xf32>
    %cst_11 = arith.constant 0.000000e+00 : f32
    %15 = vector.broadcast %cst_11 : f32 to vector<128x64xf32>
    %16 = arith.maximumf %14, %15 : vector<128x64xf32>
    %17 = arith.truncf %16 : vector<128x64xf32> to vector<128x64xbf16>
    %c0_12 = arith.constant 0 : index
    %c0_13 = arith.constant 0 : index
    %18 = vector.load %arg6[%c0_12, %c0_13] : memref<64x128xbf16, #tpu.memory_space<vmem>>, vector<64x128xbf16>
    %cst_14 = arith.constant dense<0.000000e+00> : vector<128x128xf32>
    %19 = tpu.matmul %17, %18, %cst_14 {dimension_numbers = #tpu.dot_dimension_numbers<[1], [0], [0], [1], [0, 0, 1, 1], [], []>} : vector<128x64xbf16>, vector<64x128xbf16>, vector<128x128xf32> -> vector<128x128xf32>
    %c0_15 = arith.constant 0 : index
    %c0_16 = arith.constant 0 : index
    %20 = vector.load %arg7[%c0_15, %c0_16] : memref<1x128xf32, #tpu.memory_space<vmem>>, vector<1x128xf32>
    %21 = vector.broadcast %20 : vector<1x128xf32> to vector<128x128xf32>
    %22 = arith.addf %19, %21 : vector<128x128xf32>
    %c0_17 = arith.constant 0 : index
    %c0_18 = arith.constant 0 : index
    %23 = vector.load %arg8[%c0_17, %c0_18] : memref<128x128xf32, #tpu.memory_space<vmem>>, vector<128x128xf32>
    tpu.vector_store %arg8[%c0_17, %c0_18], %22 {strides = array<i32>} : memref<128x128xf32, #tpu.memory_space<vmem>>, vector<128x128xf32>,
    return
  }
  func.func @transform_0(%arg0: i32) -> (i32, i32) {
    %c0_i32 = arith.constant 0 : i32
    %c0_i32_0 = arith.constant 0 : i32
    return %arg0, %c0_i32 : i32, i32
  }
  func.func @transform_1(%arg0: i32) -> (i32, i32) {
    %c0_i32 = arith.constant 0 : i32
    %c0_i32_0 = arith.constant 0 : i32
    %c0_i32_1 = arith.constant 0 : i32
    return %c0_i32, %c0_i32_0 : i32, i32
  }
  func.func @transform_2(%arg0: i32) -> (i32, i32) {
    %c0_i32 = arith.constant 0 : i32
    %c0_i32_0 = arith.constant 0 : i32
    %c0_i32_1 = arith.constant 0 : i32
    return %c0_i32, %c0_i32_0 : i32, i32
  }
  func.func @transform_3(%arg0: i32) -> (i32, i32) {
    %c0_i32 = arith.constant 0 : i32
    %c0_i32_0 = arith.constant 0 : i32
    %c0_i32_1 = arith.constant 0 : i32
    return %c0_i32, %c0_i32_0 : i32, i32
  }
  func.func @transform_4(%arg0: i32) -> (i32, i32) {
    %c0_i32 = arith.constant 0 : i32
    %c0_i32_0 = arith.constant 0 : i32
    %c0_i32_1 = arith.constant 0 : i32
    return %c0_i32, %c0_i32_0 : i32, i32
  }
  func.func @transform_5(%arg0: i32) -> (i32, i32) {
    %c0_i32 = arith.constant 0 : i32
    %c0_i32_0 = arith.constant 0 : i32
    %c0_i32_1 = arith.constant 0 : i32
    return %c0_i32, %c0_i32_0 : i32, i32
  }
  func.func @transform_6(%arg0: i32) -> (i32, i32) {
    %c0_i32 = arith.constant 0 : i32
    %c0_i32_0 = arith.constant 0 : i32
    %c0_i32_1 = arith.constant 0 : i32
    return %c0_i32, %c0_i32_0 : i32, i32
  }
  func.func @transform_7(%arg0: i32) -> (i32, i32) {
    %c0_i32 = arith.constant 0 : i32
    %c0_i32_0 = arith.constant 0 : i32
    return %arg0, %c0_i32 : i32, i32
  }
}

</mosaic_0001>

<llo_original>
// kernel: tpu_custom_call.1
$region0: #{tpu_custom_call.1}
  #allocation0 [shape = 'u32[]', space=smem, size = 0x4, offset = 0x4, fixed_abs, tag = 'smem constant byte address 0x4 - core index']
  #allocation1 [shape = 'u32[144,128]{1,0:T(1,128)}', space=vmem, size = 0x12000, scoped, tag = 'internal scratch']
  %s0 = inlined_call_operand.hbm [shape: f32[256,128], index: 0, kind: input, shape index: {}]
  %s1 = inlined_call_operand.vmem [shape: bf16[128,64], index: 1, kind: input, shape index: {}]
  %s2 = inlined_call_operand.vmem [shape: f32[1,64], index: 2, kind: input, shape index: {}]
  %s3 = inlined_call_operand.vmem [shape: bf16[64,64], index: 3, kind: input, shape index: {}]
  %s4 = inlined_call_operand.vmem [shape: f32[1,64], index: 4, kind: input, shape index: {}]
  %s5 = inlined_call_operand.vmem [shape: bf16[64,128], index: 5, kind: input, shape index: {}]
  %s6 = inlined_call_operand.vmem [shape: f32[1,128], index: 6, kind: input, shape index: {}]
  %s7 = inlined_call_operand.hbm [shape: f32[256,128], index: 7, kind: output, shape index: {}]
  %s8 = sld [smem:[#allocation0]]
  $region65: #{tpu_custom_call.1} parent=0
    _
  %s10 = ssub.s32 1, %s8
  %s11 = scalar_select 0, %s10, %s8
  $region1: #{tpu_custom_call.1} parent=0
    #allocation2 [shape = 'u8[131072]{0}', space=vmem, size = 0x20000, scoped, tag = 'input window, operand 0']
    #allocation3 [shape = 's32[2]{0}', space=sflag, size = 0x8, scoped, tag = 'scoped memory for tpu_custom_call.1']
    #allocation4 [shape = 's32[2]{0}', space=sflag, size = 0x8, scoped, tag = 'scoped memory for tpu_custom_call.1']
    #allocation5 [shape = 'u8[131072]{0}', space=vmem, size = 0x20000, scoped, tag = 'output window, operand 0']
    %12 = vsyncpa [#allocation3], 0
    %s13 = scalar_lea.sflag [#allocation3], 1
    %14 = vsyncpa %s13, 0
    %15 = vsyncpa [#allocation4], 0
    %s16 = scalar_lea.sflag [#allocation4], 1
    %17 = vsyncpa %s16, 0
    loop: start=0, step=1, limit=4
    $region2: #{tpu_custom_call.1} parent=1 // loop_pre_header
      _
    $region3: #{tpu_custom_call.1} parent=1 // loop_header
      %s19 = sphi 0, %s23
      %p20 = scmp.ge.s32.totalorder %s19, 4
      %s29 = sphi 0, %s31
      %s32 = sphi 0, %s29
      %s33 = sphi 0, %s32
      %s49 = sphi 0, %s33
      %s53 = sphi 0, %s53
      %s55 = sphi 0, %s53
      %s56 = sphi 0, %s55
      %s70 = sphi 0, %s56
      %s74 = sphi 0, %s74
      %s76 = sphi 0, %s74
      %s77 = sphi 0, %s76
      %s91 = sphi 0, %s77
      %s95 = sphi 0, %s95
      %s97 = sphi 0, %s95
      %s98 = sphi 0, %s97
      %s112 = sphi 0, %s98
      %s116 = sphi 0, %s116
      %s118 = sphi 0, %s116
      %s119 = sphi 0, %s118
      %s133 = sphi 0, %s119
      %s137 = sphi 0, %s137
      %s139 = sphi 0, %s137
      %s140 = sphi 0, %s139
      %s154 = sphi 0, %s140
      %s158 = sphi 0, %s158
      %s160 = sphi 0, %s158
      %s161 = sphi 0, %s160
      %s175 = sphi 0, %s161
      %s181 = sphi 0, %s183
      %s184 = sphi 0, %s181
      %s185 = sphi 0, %s184
      %s201 = sphi 0, %s185
    $region4: #{tpu_custom_call.1} parent=1 // loop_header_branch
      %22 = sbr.rel (%p20) target = $region8
    $region5: #{tpu_custom_call.1} parent=1 // loop_body
      %s24 = ssub.s32 %s19, 1
      %s25 = ssub.s32 %s19, 2
      %s26 = sadd.s32 %s19, 1
      %s27 = ssub.s32 %s19, %s26
      %p28 = scmp.eq.s32.totalorder %s27, 0
      %s30 = sadd.s32 %s29, 1
      %s31 = scalar_select %p28, %s29, %s30
      %p34 = pneg %p28
      %p35 = scmp.eq.s32.totalorder %s19, 1
      %p36 = por %p34, %p35
      %p37 = scmp.ne.s32.totalorder %s29, %s32
      %p38 = scmp.eq.s32.totalorder %s19, 0
      %p39 = por %p37, %p38
      %p40 = scmp.ne.s32.totalorder %s29, %s32
      %p41 = scmp.eq.s32.totalorder %s24, 1
      %p42 = por %p40, %p41
      %p43 = scmp.ne.s32.totalorder %s32, %s33
      %p44 = scmp.eq.s32.totalorder %s24, 0
      %p45 = por %p43, %p44
      %p46 = scmp.ne.s32.totalorder %s32, %s33
      %p47 = scmp.eq.s32.totalorder %s25, 1
      %p48 = por %p46, %p47
      %p50 = scmp.ne.s32.totalorder %s33, %s49
      %p51 = scmp.eq.s32.totalorder %s25, 0
      %p52 = por %p50, %p51
      %s54 = sadd.s32 %s53, 1
      %p57 = scmp.eq.s32.totalorder %s19, 1
      %p58 = scmp.ne.s32.totalorder %s53, %s55
      %p59 = scmp.eq.s32.totalorder %s19, 0
      %p60 = por %p58, %p59
      %p61 = scmp.ne.s32.totalorder %s53, %s55
      %p62 = scmp.eq.s32.totalorder %s24, 1
      %p63 = por %p61, %p62
      %p64 = scmp.ne.s32.totalorder %s55, %s56
      %p65 = scmp.eq.s32.totalorder %s24, 0
      %p66 = por %p64, %p65
      %p67 = scmp.ne.s32.totalorder %s55, %s56
      %p68 = scmp.eq.s32.totalorder %s25, 1
      %p69 = por %p67, %p68
      %p71 = scmp.ne.s32.totalorder %s56, %s70
      %p72 = scmp.eq.s32.totalorder %s25, 0
      %p73 = por %p71, %p72
      %s75 = sadd.s32 %s74, 1
      %p78 = scmp.eq.s32.totalorder %s19, 1
      %p79 = scmp.ne.s32.totalorder %s74, %s76
      %p80 = scmp.eq.s32.totalorder %s19, 0
      %p81 = por %p79, %p80
      %p82 = scmp.ne.s32.totalorder %s74, %s76
      %p83 = scmp.eq.s32.totalorder %s24, 1
      %p84 = por %p82, %p83
      %p85 = scmp.ne.s32.totalorder %s76, %s77
      %p86 = scmp.eq.s32.totalorder %s24, 0
      %p87 = por %p85, %p86
      %p88 = scmp.ne.s32.totalorder %s76, %s77
      %p89 = scmp.eq.s32.totalorder %s25, 1
      %p90 = por %p88, %p89
      %p92 = scmp.ne.s32.totalorder %s77, %s91
      %p93 = scmp.eq.s32.totalorder %s25, 0
      %p94 = por %p92, %p93
      %s96 = sadd.s32 %s95, 1
      %p99 = scmp.eq.s32.totalorder %s19, 1
      %p100 = scmp.ne.s32.totalorder %s95, %s97
      %p101 = scmp.eq.s32.totalorder %s19, 0
      %p102 = por %p100, %p101
      %p103 = scmp.ne.s32.totalorder %s95, %s97
      %p104 = scmp.eq.s32.totalorder %s24, 1
      %p105 = por %p103, %p104
      %p106 = scmp.ne.s32.totalorder %s97, %s98
      %p107 = scmp.eq.s32.totalorder %s24, 0
      %p108 = por %p106, %p107
      %p109 = scmp.ne.s32.totalorder %s97, %s98
      %p110 = scmp.eq.s32.totalorder %s25, 1
      %p111 = por %p109, %p110
      %p113 = scmp.ne.s32.totalorder %s98, %s112
      %p114 = scmp.eq.s32.totalorder %s25, 0
      %p115 = por %p113, %p114
      %s117 = sadd.s32 %s116, 1
      %p120 = scmp.eq.s32.totalorder %s19, 1
      %p121 = scmp.ne.s32.totalorder %s116, %s118
      %p122 = scmp.eq.s32.totalorder %s19, 0
      %p123 = por %p121, %p122
      %p124 = scmp.ne.s32.totalorder %s116, %s118
      %p125 = scmp.eq.s32.totalorder %s24, 1
      %p126 = por %p124, %p125
      %p127 = scmp.ne.s32.totalorder %s118, %s119
      %p128 = scmp.eq.s32.totalorder %s24, 0
      %p129 = por %p127, %p128
      %p130 = scmp.ne.s32.totalorder %s118, %s119
      %p131 = scmp.eq.s32.totalorder %s25, 1
      %p132 = por %p130, %p131
      %p134 = scmp.ne.s32.totalorder %s119, %s133
      %p135 = scmp.eq.s32.totalorder %s25, 0
      %p136 = por %p134, %p135
      %s138 = sadd.s32 %s137, 1
      %p141 = scmp.eq.s32.totalorder %s19, 1
      %p142 = scmp.ne.s32.totalorder %s137, %s139
      %p143 = scmp.eq.s32.totalorder %s19, 0
      %p144 = por %p142, %p143
      %p145 = scmp.ne.s32.totalorder %s137, %s139
      %p146 = scmp.eq.s32.totalorder %s24, 1
      %p147 = por %p145, %p146
      %p148 = scmp.ne.s32.totalorder %s139, %s140
      %p149 = scmp.eq.s32.totalorder %s24, 0
      %p150 = por %p148, %p149
      %p151 = scmp.ne.s32.totalorder %s139, %s140
      %p152 = scmp.eq.s32.totalorder %s25, 1
      %p153 = por %p151, %p152
      %p155 = scmp.ne.s32.totalorder %s140, %s154
      %p156 = scmp.eq.s32.totalorder %s25, 0
      %p157 = por %p155, %p156
      %s159 = sadd.s32 %s158, 1
      %p162 = scmp.eq.s32.totalorder %s19, 1
      %p163 = scmp.ne.s32.totalorder %s158, %s160
      %p164 = scmp.eq.s32.totalorder %s19, 0
      %p165 = por %p163, %p164
      %p166 = scmp.ne.s32.totalorder %s158, %s160
      %p167 = scmp.eq.s32.totalorder %s24, 1
      %p168 = por %p166, %p167
      %p169 = scmp.ne.s32.totalorder %s160, %s161
      %p170 = scmp.eq.s32.totalorder %s24, 0
      %p171 = por %p169, %p170
      %p172 = scmp.ne.s32.totalorder %s160, %s161
      %p173 = scmp.eq.s32.totalorder %s25, 1
      %p174 = por %p172, %p173
      %p176 = scmp.ne.s32.totalorder %s161, %s175
      %p177 = scmp.eq.s32.totalorder %s25, 0
      %p178 = por %p176, %p177
      %s179 = ssub.s32 %s19, %s26
      %p180 = scmp.eq.s32.totalorder %s179, 0
      %s182 = sadd.s32 %s181, 1
      %s183 = scalar_select %p180, %s181, %s182
      %p186 = pneg %p180
      %p187 = scmp.eq.s32.totalorder %s19, 1
      %p188 = por %p186, %p187
      %p189 = scmp.ne.s32.totalorder %s181, %s184
      %p190 = scmp.eq.s32.totalorder %s19, 0
      %p191 = por %p189, %p190
      %p192 = scmp.ne.s32.totalorder %s181, %s184
      %p193 = scmp.eq.s32.totalorder %s24, 1
      %p194 = por %p192, %p193
      %p195 = scmp.ne.s32.totalorder %s184, %s185
      %p196 = scmp.eq.s32.totalorder %s24, 0
      %p197 = por %p195, %p196
      %p198 = scmp.ne.s32.totalorder %s184, %s185
      %p199 = scmp.eq.s32.totalorder %s25, 1
      %p200 = por %p198, %p199
      %p202 = scmp.ne.s32.totalorder %s185, %s201
      %p203 = scmp.eq.s32.totalorder %s25, 0
      %p204 = por %p202, %p203
      %p205 = scmp.le.s32.totalorder 1, %s19
      %p206 = scmp.lt.s32.totalorder %s19, 3
      %p207 = pnand %p205, %p206
      %p208 = pneg %p207
      // Predicated region
      $region9: #{tpu_custom_call.1} parent=5 // pred_check
        _
      $region10: #{tpu_custom_call.1} parent=5 // pred_check_branch
        %210 = sbr.rel (%p207) target = $region12
      $region11: #{tpu_custom_call.1} parent=5 // pred_region
        %s211 = ssub.s32 %s19, 1
        // Predicated region
        $region13: #{tpu_custom_call.1} parent=11 // pred_check
          %p212 = pneg %p66
        $region14: #{tpu_custom_call.1} parent=11 // pred_check_branch
          %214 = sbr.rel (%p212) target = $region16
        $region15: #{tpu_custom_call.1} parent=11 // pred_region
          _
        $region16: #{tpu_custom_call.1} parent=11 // pred_fallthru
          _
        // Predicated region
        $region17: #{tpu_custom_call.1} parent=11 // pred_check
          %p215 = pneg %p87
        $region18: #{tpu_custom_call.1} parent=11 // pred_check_branch
          %217 = sbr.rel (%p215) target = $region20
        $region19: #{tpu_custom_call.1} parent=11 // pred_region
          _
        $region20: #{tpu_custom_call.1} parent=11 // pred_fallthru
          _
        // Predicated region
        $region21: #{tpu_custom_call.1} parent=11 // pred_check
          %p218 = pneg %p108
        $region22: #{tpu_custom_call.1} parent=11 // pred_check_branch
          %220 = sbr.rel (%p218) target = $region24
        $region23: #{tpu_custom_call.1} parent=11 // pred_region
          _
        $region24: #{tpu_custom_call.1} parent=11 // pred_fallthru
          _
        // Predicated region
        $region25: #{tpu_custom_call.1} parent=11 // pred_check
          %p221 = pneg %p129
        $region26: #{tpu_custom_call.1} parent=11 // pred_check_branch
          %223 = sbr.rel (%p221) target = $region28
        $region27: #{tpu_custom_call.1} parent=11 // pred_region
          _
        $region28: #{tpu_custom_call.1} parent=11 // pred_fallthru
          _
        // Predicated region
        $region29: #{tpu_custom_call.1} parent=11 // pred_check
          %p224 = pneg %p150
        $region30: #{tpu_custom_call.1} parent=11 // pred_check_branch
          %226 = sbr.rel (%p224) target = $region32
        $region31: #{tpu_custom_call.1} parent=11 // pred_region
          _
        $region32: #{tpu_custom_call.1} parent=11 // pred_fallthru
          _
        // Predicated region
        $region33: #{tpu_custom_call.1} parent=11 // pred_check
          %p227 = pneg %p171
        $region34: #{tpu_custom_call.1} parent=11 // pred_check_branch
          %229 = sbr.rel (%p227) target = $region36
        $region35: #{tpu_custom_call.1} parent=11 // pred_region
          _
        $region36: #{tpu_custom_call.1} parent=11 // pred_fallthru
          _
      $region12: #{tpu_custom_call.1} parent=5 // pred_fallthru
        _
      %p230 = scmp.lt.s32.totalorder %s19, 2
      // Predicated region
      $region37: #{tpu_custom_call.1} parent=5 // pred_check
        %p231 = pneg %p230
      $region38: #{tpu_custom_call.1} parent=5 // pred_check_branch
        %233 = sbr.rel (%p231) target = $region40
      $region39: #{tpu_custom_call.1} parent=5 // pred_region
        // Predicated region
        $region41: #{tpu_custom_call.1} parent=39 // pred_check
          %p234 = pneg %p39
        $region42: #{tpu_custom_call.1} parent=39 // pred_check_branch
          %236 = sbr.rel (%p234) target = $region44
        $region43: #{tpu_custom_call.1} parent=39 // pred_region
          %s237 = sand.u32 %s29, 1
          %s238 = scalar_lea.sflag [#allocation3], %s237
          %s239 = sand.u32 %s29, 1
          %s240 = smul.addr %s239, 128
          %s241 = scalar_lea.vmem [#allocation2], %s240
          %s242 = smul.u32 16, %s19
          %s244 = ssub.s32 2048, 2048
          %245 = vsyncadd %s238, %s244
          %s246 = smul.addr %s242, 128
          %s247 = scalar_lea.hbm %s0, %s246
          %s248 = sshll.u32 %s241, 4
          %s249 = int_to_ptr.vmem [resolvable:$true] %s248
          %254 = dma.hbm_to_vmem [thread:$0]  %s247, 2048, %s249, %s238, 128, 128, 8
        $region44: #{tpu_custom_call.1} parent=39 // pred_fallthru
          _
      $region40: #{tpu_custom_call.1} parent=5 // pred_fallthru
        _
      %p255 = scmp.le.s32.totalorder 1, %s19
      %p256 = scmp.lt.s32.totalorder %s19, 3
      %p257 = pnand %p255, %p256
      %p258 = pneg %p257
      // Predicated region
      $region45: #{tpu_custom_call.1} parent=5 // pred_check
        _
      $region46: #{tpu_custom_call.1} parent=5 // pred_check_branch
        %260 = sbr.rel (%p257) target = $region48
      $region47: #{tpu_custom_call.1} parent=5 // pred_region
        %s261 = ssub.s32 %s19, 1
        %s262 = sand.u32 %s32, 1
        %s263 = scalar_lea.sflag [#allocation3], %s262
        %s264 = sand.u32 %s32, 1
        %s265 = smul.addr %s264, 128
        %s266 = scalar_lea.vmem [#allocation2], %s265
        // Predicated region
        $region49: #{tpu_custom_call.1} parent=47 // pred_check
          %p267 = pneg %p45
        $region50: #{tpu_custom_call.1} parent=47 // pred_check_branch
          %269 = sbr.rel (%p267) target = $region52
        $region51: #{tpu_custom_call.1} parent=47 // pred_region
          %270 = dma.done %s263, 2048
        $region52: #{tpu_custom_call.1} parent=47 // pred_fallthru
          _
        %s271 = sand.u32 %s32, 1
        %s272 = scalar_lea.sflag [#allocation3], %s271
        %s273 = sand.u32 %s32, 1
        %s274 = smul.addr %s273, 128
        %s275 = scalar_lea.vmem [#allocation2], %s274
        %p276 = pneg %p45
        %p277 = pneg %p42
        %p278 = pneg %p66
        %p279 = pneg %p63
        %p280 = pneg %p87
        %p281 = pneg %p84
        %p282 = pneg %p108
        %p283 = pneg %p105
        %p284 = pneg %p129
        %p285 = pneg %p126
        %p286 = pneg %p150
        %p287 = pneg %p147
        %p288 = pneg %p171
        %p289 = pneg %p168
        %p290 = pneg %p197
        %p291 = pneg %p194
        %s292 = sand.u32 %s184, 1
        %s293 = scalar_lea.sflag [#allocation4], %s292
        %s294 = sand.u32 %s184, 1
        %s295 = smul.addr %s294, 128
        %s296 = scalar_lea.vmem [#allocation5], %s295
        %s297 = smul.u32 16, %s24
        %s298 = smul.u32 16, %s24
        %v300 = vld [vmem:[%s266] sm:$0xff]
        %v301 = vld [vmem:[%s266 + $0x8] sm:$0xff]
        %v302 = vld [vmem:[%s266 + $0x10] sm:$0xff]
        %v303 = vld [vmem:[%s266 + $0x18] sm:$0xff]
        %v304 = vld [vmem:[%s266 + $0x20] sm:$0xff]
        %v305 = vld [vmem:[%s266 + $0x28] sm:$0xff]
        %v306 = vld [vmem:[%s266 + $0x30] sm:$0xff]
        %v307 = vld [vmem:[%s266 + $0x38] sm:$0xff]
        %v308 = vld [vmem:[%s266 + $0x40] sm:$0xff]
        %v309 = vld [vmem:[%s266 + $0x48] sm:$0xff]
        %v310 = vld [vmem:[%s266 + $0x50] sm:$0xff]
        %v311 = vld [vmem:[%s266 + $0x58] sm:$0xff]
        %v312 = vld [vmem:[%s266 + $0x60] sm:$0xff]
        %v313 = vld [vmem:[%s266 + $0x68] sm:$0xff]
        %v314 = vld [vmem:[%s266 + $0x70] sm:$0xff]
        %v315 = vld [vmem:[%s266 + $0x78] sm:$0xff]
        %v316 = vpack.c.bf16 %v301, %v300
        %v317 = vpack.c.bf16 %v303, %v302
        %v318 = vpack.c.bf16 %v305, %v304
        %v319 = vpack.c.bf16 %v307, %v306
        %v320 = vpack.c.bf16 %v309, %v308
        %v321 = vpack.c.bf16 %v311, %v310
        %v322 = vpack.c.bf16 %v313, %v312
        %v323 = vpack.c.bf16 %v315, %v314
        %v324 = vld [vmem:[%s1] sm:$0xf]
        %v325 = vld [vmem:[%s1 + $0x4] sm:$0xf]
        %v326 = vld [vmem:[%s1 + $0x8] sm:$0xf]
        %v327 = vld [vmem:[%s1 + $0xc] sm:$0xf]
        %v328 = vld [vmem:[%s1 + $0x10] sm:$0xf]
        %v329 = vld [vmem:[%s1 + $0x14] sm:$0xf]
        %v330 = vld [vmem:[%s1 + $0x18] sm:$0xf]
        %v331 = vld [vmem:[%s1 + $0x1c] sm:$0xf]
        %v332 = vld [vmem:[%s1 + $0x20] sm:$0xf]
        %v333 = vld [vmem:[%s1 + $0x24] sm:$0xf]
        %v334 = vld [vmem:[%s1 + $0x28] sm:$0xf]
        %v335 = vld [vmem:[%s1 + $0x2c] sm:$0xf]
        %v336 = vld [vmem:[%s1 + $0x30] sm:$0xf]
        %v337 = vld [vmem:[%s1 + $0x34] sm:$0xf]
        %v338 = vld [vmem:[%s1 + $0x38] sm:$0xf]
        %v339 = vld [vmem:[%s1 + $0x3c] sm:$0xf]
        %v340 = vld [vmem:[%s2] sm:$0x1]
        %v342 = vlaneseq
        %v343 = vshrl.u32 %v342, 7
        %v344 = vsub.s32 0, %v343
        %v345 = vrot.slane %v340, %v344
        %v363 = vunpack.c.l.b16 %v324
        %v364 = vunpack.c.l.b16 %v325
        %v365 = vunpack.c.l.b16 %v326
        %v366 = vunpack.c.l.b16 %v327
        %v367 = vunpack.c.l.b16 %v328
        %v368 = vunpack.c.l.b16 %v329
        %v369 = vunpack.c.l.b16 %v330
        %v370 = vunpack.c.l.b16 %v331
        %v371 = vunpack.c.l.b16 %v332
        %v372 = vunpack.c.l.b16 %v333
        %v373 = vunpack.c.l.b16 %v334
        %v374 = vunpack.c.l.b16 %v335
        %v375 = vunpack.c.l.b16 %v336
        %v376 = vunpack.c.l.b16 %v337
        %v377 = vunpack.c.l.b16 %v338
        %v378 = vunpack.c.l.b16 %v339
        %v379 = vpack.c.b16 %v364, %v363
        %v380 = vpack.c.b16 %v366, %v365
        %v381 = vpack.c.b16 %v368, %v367
        %v382 = vpack.c.b16 %v370, %v369
        %v383 = vpack.c.b16 %v372, %v371
        %v384 = vpack.c.b16 %v374, %v373
        %v385 = vpack.c.b16 %v376, %v375
        %v386 = vpack.c.b16 %v378, %v377
        %395 = vmatprep.subr.bf16.mxu0 0
        %396 = vmatpush1.bf16.msra.mxu0 %v379
        %397 = vmatprep.subr.bf16.mxu0 0
        %398 = vmatpush1.bf16.msra.mxu0 %v380
        %399 = vmatprep.subr.bf16.mxu0 0
        %400 = vmatpush1.bf16.msra.mxu0 %v381
        %401 = vmatprep.subr.bf16.mxu0 0
        %402 = vmatpush1.bf16.msra.mxu0 %v382
        %403 = vmatprep.subr.bf16.mxu0 0
        %404 = vmatpush1.bf16.msra.mxu0 %v383
        %405 = vmatprep.subr.bf16.mxu0 0
        %406 = vmatpush1.bf16.msra.mxu0 %v384
        %407 = vmatprep.subr.bf16.mxu0 0
        %408 = vmatpush1.bf16.msra.mxu0 %v385
        %409 = vmatprep.subr.bf16.mxu0 0
        %410 = vmatpush1.bf16.msra.mxu0 %v386
        %411 = vmatprep.subr.bf16.mxu0 0
        %412 = vmatpush1.bf16.msra.mxu0 0
        %413 = vmatprep.subr.bf16.mxu0 0
        %414 = vmatpush1.bf16.msra.mxu0 0
        %415 = vmatprep.subr.bf16.mxu0 0
        %416 = vmatpush1.bf16.msra.mxu0 0
        %417 = vmatprep.subr.bf16.mxu0 0
        %418 = vmatpush1.bf16.msra.mxu0 0
        %419 = vmatprep.subr.bf16.mxu0 0
        %420 = vmatpush1.bf16.msra.mxu0 0
        %421 = vmatprep.subr.bf16.mxu0 0
        %422 = vmatpush1.bf16.msra.mxu0 0
        %423 = vmatprep.subr.bf16.mxu0 0
        %424 = vmatpush1.bf16.msra.mxu0 0
        %425 = vmatprep.subr.bf16.mxu0 0
        %426 = vmatpush1.bf16.msra.mxu0 0
        %427 = vmatprep.mubr.bf16.mxu0 0
        %428 = vmatmul.mubr.bf16.gmra.mrb[0].mxu0 %v316
        %v429 = vpop.f32.mrb[0].mxu0
        %v430 = vadd.f32 %v345, %v429
        %v431 = vpop.f32.mrb[0].mxu0
        %v432 = vpop.f32.mrb[0].mxu0
        %v433 = vadd.f32 %v345, %v432
        %v434 = vpop.f32.mrb[0].mxu0
        %435 = vmatprep.mubr.bf16.mxu0 0
        %436 = vmatmul.mubr.bf16.gmra.mrb[0].mxu0 %v317
        %v437 = vpop.f32.mrb[0].mxu0
        %v438 = vadd.f32 %v345, %v437
        %v439 = vpop.f32.mrb[0].mxu0
        %v440 = vpop.f32.mrb[0].mxu0
        %v441 = vadd.f32 %v345, %v440
        %v442 = vpop.f32.mrb[0].mxu0
        %443 = vmatprep.mubr.bf16.mxu0 0
        %444 = vmatmul.mubr.bf16.gmra.mrb[0].mxu0 %v318
        %v445 = vpop.f32.mrb[0].mxu0
        %v446 = vadd.f32 %v345, %v445
        %v447 = vpop.f32.mrb[0].mxu0
        %v448 = vpop.f32.mrb[0].mxu0
        %v449 = vadd.f32 %v345, %v448
        %v450 = vpop.f32.mrb[0].mxu0
        %451 = vmatprep.mubr.bf16.mxu0 0
        %452 = vmatmul.mubr.bf16.gmra.mrb[0].mxu0 %v319
        %v453 = vpop.f32.mrb[0].mxu0
        %v454 = vadd.f32 %v345, %v453
        %v455 = vpop.f32.mrb[0].mxu0
        %v456 = vpop.f32.mrb[0].mxu0
        %v457 = vadd.f32 %v345, %v456
        %v458 = vpop.f32.mrb[0].mxu0
        %459 = vmatprep.mubr.bf16.mxu0 0
        %460 = vmatmul.mubr.bf16.gmra.mrb[0].mxu0 %v320
        %v461 = vpop.f32.mrb[0].mxu0
        %v462 = vadd.f32 %v345, %v461
        %v463 = vpop.f32.mrb[0].mxu0
        %v464 = vpop.f32.mrb[0].mxu0
        %v465 = vadd.f32 %v345, %v464
        %v466 = vpop.f32.mrb[0].mxu0
        %467 = vmatprep.mubr.bf16.mxu0 0
        %468 = vmatmul.mubr.bf16.gmra.mrb[0].mxu0 %v321
        %v469 = vpop.f32.mrb[0].mxu0
        %v470 = vadd.f32 %v345, %v469
        %v471 = vpop.f32.mrb[0].mxu0
        %v472 = vpop.f32.mrb[0].mxu0
        %v473 = vadd.f32 %v345, %v472
        %v474 = vpop.f32.mrb[0].mxu0
        %475 = vmatprep.mubr.bf16.mxu0 0
        %476 = vmatmul.mubr.bf16.gmra.mrb[0].mxu0 %v322
        %v477 = vpop.f32.mrb[0].mxu0
        %v478 = vadd.f32 %v345, %v477
        %v479 = vpop.f32.mrb[0].mxu0
        %v480 = vpop.f32.mrb[0].mxu0
        %v481 = vadd.f32 %v345, %v480
        %v482 = vpop.f32.mrb[0].mxu0
        %483 = vmatprep.mubr.bf16.mxu0 0
        %484 = vmatmul.mubr.bf16.gmra.mrb[0].mxu0 %v323
        %v485 = vpop.f32.mrb[0].mxu0
        %v486 = vadd.f32 %v345, %v485
        %v487 = vpop.f32.mrb[0].mxu0
        %v488 = vpop.f32.mrb[0].mxu0
        %v489 = vadd.f32 %v345, %v488
        %v490 = vpop.f32.mrb[0].mxu0
        %491 = vdwg.mxu0
        %v492 = vmax.f32 %v430, 0.0
        %v493 = vmax.f32 %v433, 0.0
        %v494 = vmax.f32 %v438, 0.0
        %v495 = vmax.f32 %v441, 0.0
        %v496 = vmax.f32 %v446, 0.0
        %v497 = vmax.f32 %v449, 0.0
        %v498 = vmax.f32 %v454, 0.0
        %v499 = vmax.f32 %v457, 0.0
        %v500 = vmax.f32 %v462, 0.0
        %v501 = vmax.f32 %v465, 0.0
        %v502 = vmax.f32 %v470, 0.0
        %v503 = vmax.f32 %v473, 0.0
        %v504 = vmax.f32 %v478, 0.0
        %v505 = vmax.f32 %v481, 0.0
        %v506 = vmax.f32 %v486, 0.0
        %v507 = vmax.f32 %v489, 0.0
        %v508 = vpack.c.bf16 %v493, %v492
        %v509 = vpack.c.bf16 %v495, %v494
        %v510 = vpack.c.bf16 %v497, %v496
        %v511 = vpack.c.bf16 %v499, %v498
        %v512 = vpack.c.bf16 %v501, %v500
        %v513 = vpack.c.bf16 %v503, %v502
        %v514 = vpack.c.bf16 %v505, %v504
        %v515 = vpack.c.bf16 %v507, %v506
        %v516 = vld [vmem:[%s3] sm:$0xf]
        %v517 = vld [vmem:[%s3 + $0x4] sm:$0xf]
        %v518 = vld [vmem:[%s3 + $0x8] sm:$0xf]
        %v519 = vld [vmem:[%s3 + $0xc] sm:$0xf]
        %v520 = vld [vmem:[%s3 + $0x10] sm:$0xf]
        %v521 = vld [vmem:[%s3 + $0x14] sm:$0xf]
        %v522 = vld [vmem:[%s3 + $0x18] sm:$0xf]
        %v523 = vld [vmem:[%s3 + $0x1c] sm:$0xf]
        %v524 = vld [vmem:[%s4] sm:$0x1]
        %v526 = vlaneseq
        %v527 = vshrl.u32 %v526, 7
        %v528 = vsub.s32 0, %v527
        %v529 = vrot.slane %v524, %v528
        %v539 = vunpack.c.l.b16 %v516
        %v540 = vunpack.c.l.b16 %v517
        %v541 = vunpack.c.l.b16 %v518
        %v542 = vunpack.c.l.b16 %v519
        %v543 = vunpack.c.l.b16 %v520
        %v544 = vunpack.c.l.b16 %v521
        %v545 = vunpack.c.l.b16 %v522
        %v546 = vunpack.c.l.b16 %v523
        %v547 = vpack.c.b16 %v540, %v539
        %v548 = vpack.c.b16 %v542, %v541
        %v549 = vpack.c.b16 %v544, %v543
        %v550 = vpack.c.b16 %v546, %v545
        %vm555 = vcmask 523264
        %v557 = vsel %vm555, %v508, 0
        %v560 = vsel %vm555, %v509, 0
        %v563 = vsel %vm555, %v510, 0
        %v566 = vsel %vm555, %v511, 0
        %v569 = vsel %vm555, %v512, 0
        %v572 = vsel %vm555, %v513, 0
        %v575 = vsel %vm555, %v514, 0
        %v578 = vsel %vm555, %v515, 0
        %580 = vmatprep.subr.bf16.mxu0 0
        %581 = vmatpush1.bf16.msra.mxu0 %v547
        %582 = vmatprep.subr.bf16.mxu0 0
        %583 = vmatpush1.bf16.msra.mxu0 %v548
        %584 = vmatprep.subr.bf16.mxu0 0
        %585 = vmatpush1.bf16.msra.mxu0 %v549
        %586 = vmatprep.subr.bf16.mxu0 0
        %587 = vmatpush1.bf16.msra.mxu0 %v550
        %588 = vmatprep.subr.bf16.mxu0 0
        %589 = vmatpush1.bf16.msra.mxu0 0
        %590 = vmatprep.subr.bf16.mxu0 0
        %591 = vmatpush1.bf16.msra.mxu0 0
        %592 = vmatprep.subr.bf16.mxu0 0
        %593 = vmatpush1.bf16.msra.mxu0 0
        %594 = vmatprep.subr.bf16.mxu0 0
        %595 = vmatpush1.bf16.msra.mxu0 0
        %596 = vmatprep.subr.bf16.mxu0 0
        %597 = vmatpush1.bf16.msra.mxu0 0
        %598 = vmatprep.subr.bf16.mxu0 0
        %599 = vmatpush1.bf16.msra.mxu0 0
        %600 = vmatprep.subr.bf16.mxu0 0
        %601 = vmatpush1.bf16.msra.mxu0 0
        %602 = vmatprep.subr.bf16.mxu0 0
        %603 = vmatpush1.bf16.msra.mxu0 0
        %604 = vmatprep.subr.bf16.mxu0 0
        %605 = vmatpush1.bf16.msra.mxu0 0
        %606 = vmatprep.subr.bf16.mxu0 0
        %607 = vmatpush1.bf16.msra.mxu0 0
        %608 = vmatprep.subr.bf16.mxu0 0
        %609 = vmatpush1.bf16.msra.mxu0 0
        %610 = vmatprep.subr.bf16.mxu0 0
        %611 = vmatpush1.bf16.msra.mxu0 0
        %612 = vmatprep.mubr.bf16.mxu0 0
        %613 = vmatmul.mubr.bf16.gmra.mrb[0].mxu0 %v557
        %v614 = vpop.f32.mrb[0].mxu0
        %v615 = vadd.f32 %v529, %v614
        %v616 = vpop.f32.mrb[0].mxu0
        %v617 = vpop.f32.mrb[0].mxu0
        %v618 = vadd.f32 %v529, %v617
        %v619 = vpop.f32.mrb[0].mxu0
        %620 = vmatprep.mubr.bf16.mxu0 0
        %621 = vmatmul.mubr.bf16.gmra.mrb[0].mxu0 %v560
        %v622 = vpop.f32.mrb[0].mxu0
        %v623 = vadd.f32 %v529, %v622
        %v624 = vpop.f32.mrb[0].mxu0
        %v625 = vpop.f32.mrb[0].mxu0
        %v626 = vadd.f32 %v529, %v625
        %v627 = vpop.f32.mrb[0].mxu0
        %628 = vmatprep.mubr.bf16.mxu0 0
        %629 = vmatmul.mubr.bf16.gmra.mrb[0].mxu0 %v563
        %v630 = vpop.f32.mrb[0].mxu0
        %v631 = vadd.f32 %v529, %v630
        %v632 = vpop.f32.mrb[0].mxu0
        %v633 = vpop.f32.mrb[0].mxu0
        %v634 = vadd.f32 %v529, %v633
        %v635 = vpop.f32.mrb[0].mxu0
        %636 = vmatprep.mubr.bf16.mxu0 0
        %637 = vmatmul.mubr.bf16.gmra.mrb[0].mxu0 %v566
        %v638 = vpop.f32.mrb[0].mxu0
        %v639 = vadd.f32 %v529, %v638
        %v640 = vpop.f32.mrb[0].mxu0
        %v641 = vpop.f32.mrb[0].mxu0
        %v642 = vadd.f32 %v529, %v641
        %v643 = vpop.f32.mrb[0].mxu0
        %644 = vmatprep.mubr.bf16.mxu0 0
        %645 = vmatmul.mubr.bf16.gmra.mrb[0].mxu0 %v569
        %v646 = vpop.f32.mrb[0].mxu0
        %v647 = vadd.f32 %v529, %v646
        %v648 = vpop.f32.mrb[0].mxu0
        %v649 = vpop.f32.mrb[0].mxu0
        %v650 = vadd.f32 %v529, %v649
        %v651 = vpop.f32.mrb[0].mxu0
        %652 = vmatprep.mubr.bf16.mxu0 0
        %653 = vmatmul.mubr.bf16.gmra.mrb[0].mxu0 %v572
        %v654 = vpop.f32.mrb[0].mxu0
        %v655 = vadd.f32 %v529, %v654
        %v656 = vpop.f32.mrb[0].mxu0
        %v657 = vpop.f32.mrb[0].mxu0
        %v658 = vadd.f32 %v529, %v657
        %v659 = vpop.f32.mrb[0].mxu0
        %660 = vmatprep.mubr.bf16.mxu0 0
        %661 = vmatmul.mubr.bf16.gmra.mrb[0].mxu0 %v575
        %v662 = vpop.f32.mrb[0].mxu0
        %v663 = vadd.f32 %v529, %v662
        %v664 = vpop.f32.mrb[0].mxu0
        %v665 = vpop.f32.mrb[0].mxu0
        %v666 = vadd.f32 %v529, %v665
        %v667 = vpop.f32.mrb[0].mxu0
        %668 = vmatprep.mubr.bf16.mxu0 0
        %669 = vmatmul.mubr.bf16.gmra.mrb[0].mxu0 %v578
        %v670 = vpop.f32.mrb[0].mxu0
        %v671 = vadd.f32 %v529, %v670
        %v672 = vpop.f32.mrb[0].mxu0
        %v673 = vpop.f32.mrb[0].mxu0
        %v674 = vadd.f32 %v529, %v673
        %v675 = vpop.f32.mrb[0].mxu0
        %676 = vdwg.mxu0
        %v677 = vmax.f32 %v615, 0.0
        %v678 = vmax.f32 %v618, 0.0
        %v679 = vmax.f32 %v623, 0.0
        %v680 = vmax.f32 %v626, 0.0
        %v681 = vmax.f32 %v631, 0.0
        %v682 = vmax.f32 %v634, 0.0
        %v683 = vmax.f32 %v639, 0.0
        %v684 = vmax.f32 %v642, 0.0
        %v685 = vmax.f32 %v647, 0.0
        %v686 = vmax.f32 %v650, 0.0
        %v687 = vmax.f32 %v655, 0.0
        %v688 = vmax.f32 %v658, 0.0
        %v689 = vmax.f32 %v663, 0.0
        %v690 = vmax.f32 %v666, 0.0
        %v691 = vmax.f32 %v671, 0.0
        %v692 = vmax.f32 %v674, 0.0
        %v693 = vpack.c.bf16 %v678, %v677
        %v694 = vpack.c.bf16 %v680, %v679
        %v695 = vpack.c.bf16 %v682, %v681
        %v696 = vpack.c.bf16 %v684, %v683
        %v697 = vpack.c.bf16 %v686, %v685
        %v698 = vpack.c.bf16 %v688, %v687
        %v699 = vpack.c.bf16 %v690, %v689
        %v700 = vpack.c.bf16 %v692, %v691
        %v701 = vld [vmem:[%s5] sm:$0xf]
        %v702 = vld [vmem:[%s5 + $0x4] sm:$0xf]
        %v703 = vld [vmem:[%s5 + $0x8] sm:$0xf]
        %v704 = vld [vmem:[%s5 + $0xc] sm:$0xf]
        %v705 = vld [vmem:[%s5 + $0x10] sm:$0xf]
        %v706 = vld [vmem:[%s5 + $0x14] sm:$0xf]
        %v707 = vld [vmem:[%s5 + $0x18] sm:$0xf]
        %v708 = vld [vmem:[%s5 + $0x1c] sm:$0xf]
        %v709 = vld [vmem:[%s6] sm:$0x1]
        %v711 = vlaneseq
        %v712 = vshrl.u32 %v711, 7
        %v713 = vsub.s32 0, %v712
        %v714 = vrot.slane %v709, %v713
        %v724 = vunpack.c.l.b16 %v701
        %v725 = vunpack.c.l.b16 %v702
        %v726 = vunpack.c.l.b16 %v703
        %v727 = vunpack.c.l.b16 %v704
        %v728 = vunpack.c.l.b16 %v705
        %v729 = vunpack.c.l.b16 %v706
        %v730 = vunpack.c.l.b16 %v707
        %v731 = vunpack.c.l.b16 %v708
        %v732 = vpack.c.b16 %v725, %v724
        %v733 = vpack.c.b16 %v727, %v726
        %v734 = vpack.c.b16 %v729, %v728
        %v735 = vpack.c.b16 %v731, %v730
        %v741 = vsel %vm555, %v693, 0
        %v744 = vsel %vm555, %v694, 0
        %v747 = vsel %vm555, %v695, 0
        %v750 = vsel %vm555, %v696, 0
        %v753 = vsel %vm555, %v697, 0
        %v756 = vsel %vm555, %v698, 0
        %v759 = vsel %vm555, %v699, 0
        %v762 = vsel %vm555, %v700, 0
        %764 = vmatprep.subr.bf16.mxu0 0
        %765 = vmatpush1.bf16.msra.mxu0 %v732
        %766 = vmatprep.subr.bf16.mxu0 0
        %767 = vmatpush1.bf16.msra.mxu0 %v733
        %768 = vmatprep.subr.bf16.mxu0 0
        %769 = vmatpush1.bf16.msra.mxu0 %v734
        %770 = vmatprep.subr.bf16.mxu0 0
        %771 = vmatpush1.bf16.msra.mxu0 %v735
        %772 = vmatprep.subr.bf16.mxu0 0
        %773 = vmatpush1.bf16.msra.mxu0 0
        %774 = vmatprep.subr.bf16.mxu0 0
        %775 = vmatpush1.bf16.msra.mxu0 0
        %776 = vmatprep.subr.bf16.mxu0 0
        %777 = vmatpush1.bf16.msra.mxu0 0
        %778 = vmatprep.subr.bf16.mxu0 0
        %779 = vmatpush1.bf16.msra.mxu0 0
        %780 = vmatprep.subr.bf16.mxu0 0
        %781 = vmatpush1.bf16.msra.mxu0 0
        %782 = vmatprep.subr.bf16.mxu0 0
        %783 = vmatpush1.bf16.msra.mxu0 0
        %784 = vmatprep.subr.bf16.mxu0 0
        %785 = vmatpush1.bf16.msra.mxu0 0
        %786 = vmatprep.subr.bf16.mxu0 0
        %787 = vmatpush1.bf16.msra.mxu0 0
        %788 = vmatprep.subr.bf16.mxu0 0
        %789 = vmatpush1.bf16.msra.mxu0 0
        %790 = vmatprep.subr.bf16.mxu0 0
        %791 = vmatpush1.bf16.msra.mxu0 0
        %792 = vmatprep.subr.bf16.mxu0 0
        %793 = vmatpush1.bf16.msra.mxu0 0
        %794 = vmatprep.subr.bf16.mxu0 0
        %795 = vmatpush1.bf16.msra.mxu0 0
        %796 = vmatprep.mubr.bf16.mxu0 0
        %797 = vmatmul.mubr.bf16.gmra.mrb[0].mxu0 %v741
        %v798 = vpop.f32.mrb[0].mxu0
        %v799 = vadd.f32 %v714, %v798
        %v800 = vpop.f32.mrb[0].mxu0
        %v801 = vpop.f32.mrb[0].mxu0
        %v802 = vadd.f32 %v714, %v801
        %v803 = vpop.f32.mrb[0].mxu0
        %804 = vmatprep.mubr.bf16.mxu0 0
        %805 = vmatmul.mubr.bf16.gmra.mrb[0].mxu0 %v744
        %v806 = vpop.f32.mrb[0].mxu0
        %v807 = vadd.f32 %v714, %v806
        %v808 = vpop.f32.mrb[0].mxu0
        %v809 = vpop.f32.mrb[0].mxu0
        %v810 = vadd.f32 %v714, %v809
        %v811 = vpop.f32.mrb[0].mxu0
        %812 = vmatprep.mubr.bf16.mxu0 0
        %813 = vmatmul.mubr.bf16.gmra.mrb[0].mxu0 %v747
        %v814 = vpop.f32.mrb[0].mxu0
        %v815 = vadd.f32 %v714, %v814
        %v816 = vpop.f32.mrb[0].mxu0
        %v817 = vpop.f32.mrb[0].mxu0
        %v818 = vadd.f32 %v714, %v817
        %v819 = vpop.f32.mrb[0].mxu0
        %820 = vmatprep.mubr.bf16.mxu0 0
        %821 = vmatmul.mubr.bf16.gmra.mrb[0].mxu0 %v750
        %v822 = vpop.f32.mrb[0].mxu0
        %v823 = vadd.f32 %v714, %v822
        %v824 = vpop.f32.mrb[0].mxu0
        %v825 = vpop.f32.mrb[0].mxu0
        %v826 = vadd.f32 %v714, %v825
        %v827 = vpop.f32.mrb[0].mxu0
        %828 = vmatprep.mubr.bf16.mxu0 0
        %829 = vmatmul.mubr.bf16.gmra.mrb[0].mxu0 %v753
        %v830 = vpop.f32.mrb[0].mxu0
        %v831 = vadd.f32 %v714, %v830
        %v832 = vpop.f32.mrb[0].mxu0
        %v833 = vpop.f32.mrb[0].mxu0
        %v834 = vadd.f32 %v714, %v833
        %v835 = vpop.f32.mrb[0].mxu0
        %836 = vmatprep.mubr.bf16.mxu0 0
        %837 = vmatmul.mubr.bf16.gmra.mrb[0].mxu0 %v756
        %v838 = vpop.f32.mrb[0].mxu0
        %v839 = vadd.f32 %v714, %v838
        %v840 = vpop.f32.mrb[0].mxu0
        %v841 = vpop.f32.mrb[0].mxu0
        %v842 = vadd.f32 %v714, %v841
        %v843 = vpop.f32.mrb[0].mxu0
        %844 = vmatprep.mubr.bf16.mxu0 0
        %845 = vmatmul.mubr.bf16.gmra.mrb[0].mxu0 %v759
        %v846 = vpop.f32.mrb[0].mxu0
        %v847 = vadd.f32 %v714, %v846
        %v848 = vpop.f32.mrb[0].mxu0
        %v849 = vpop.f32.mrb[0].mxu0
        %v850 = vadd.f32 %v714, %v849
        %v851 = vpop.f32.mrb[0].mxu0
        %852 = vmatprep.mubr.bf16.mxu0 0
        %853 = vmatmul.mubr.bf16.gmra.mrb[0].mxu0 %v762
        %v854 = vpop.f32.mrb[0].mxu0
        %v855 = vadd.f32 %v714, %v854
        %v856 = vpop.f32.mrb[0].mxu0
        %v857 = vpop.f32.mrb[0].mxu0
        %v858 = vadd.f32 %v714, %v857
        %v859 = vpop.f32.mrb[0].mxu0
        %860 = vdwg.mxu0
        %861 = vst [vmem:[%s296] sm:$0xff] %v799
        %862 = vst [vmem:[%s296 + $0x8] sm:$0xff] %v802
        %863 = vst [vmem:[%s296 + $0x10] sm:$0xff] %v807
        %864 = vst [vmem:[%s296 + $0x18] sm:$0xff] %v810
        %865 = vst [vmem:[%s296 + $0x20] sm:$0xff] %v815
        %866 = vst [vmem:[%s296 + $0x28] sm:$0xff] %v818
        %867 = vst [vmem:[%s296 + $0x30] sm:$0xff] %v823
        %868 = vst [vmem:[%s296 + $0x38] sm:$0xff] %v826
        %869 = vst [vmem:[%s296 + $0x40] sm:$0xff] %v831
        %870 = vst [vmem:[%s296 + $0x48] sm:$0xff] %v834
        %871 = vst [vmem:[%s296 + $0x50] sm:$0xff] %v839
        %872 = vst [vmem:[%s296 + $0x58] sm:$0xff] %v842
        %873 = vst [vmem:[%s296 + $0x60] sm:$0xff] %v847
        %874 = vst [vmem:[%s296 + $0x68] sm:$0xff] %v850
        %875 = vst [vmem:[%s296 + $0x70] sm:$0xff] %v855
        %876 = vst [vmem:[%s296 + $0x78] sm:$0xff] %v858
        %s877 = sand.u32 %s184, 1
        %s878 = scalar_lea.sflag [#allocation4], %s877
        %s879 = sand.u32 %s184, 1
        %s880 = smul.addr %s879, 128
        %s881 = scalar_lea.vmem [#allocation5], %s880
        // Predicated region
        $region53: #{tpu_custom_call.1} parent=47 // pred_check
          %p882 = pneg %p194
        $region54: #{tpu_custom_call.1} parent=47 // pred_check_branch
          %884 = sbr.rel (%p882) target = $region56
        $region55: #{tpu_custom_call.1} parent=47 // pred_region
          %s885 = smul.u32 16, %s24
          %s887 = ssub.s32 2048, 2048
          %888 = vsyncadd %s878, %s887
          %s889 = smul.addr %s885, 128
          %s890 = scalar_lea.hbm %s7, %s889
          %s891 = sshll.u32 %s881, 4
          %s892 = int_to_ptr.vmem [resolvable:$true] %s891
          %897 = dma.vmem_to_hbm [thread:$0]  %s892, 2048, %s890, %s878, 128, 128, 8
        $region56: #{tpu_custom_call.1} parent=47 // pred_fallthru
          _
      $region48: #{tpu_custom_call.1} parent=5 // pred_fallthru
        _
      %p898 = scmp.le.s32.totalorder 2, %s19
      // Predicated region
      $region57: #{tpu_custom_call.1} parent=5 // pred_check
        %p899 = pneg %p898
      $region58: #{tpu_custom_call.1} parent=5 // pred_check_branch
        %901 = sbr.rel (%p899) target = $region60
      $region59: #{tpu_custom_call.1} parent=5 // pred_region
        %s902 = ssub.s32 %s19, 2
        // Predicated region
        $region61: #{tpu_custom_call.1} parent=59 // pred_check
          %p903 = pneg %p200
        $region62: #{tpu_custom_call.1} parent=59 // pred_check_branch
          %905 = sbr.rel (%p903) target = $region64
        $region63: #{tpu_custom_call.1} parent=59 // pred_region
          %s906 = sand.u32 %s185, 1
          %s907 = scalar_lea.sflag [#allocation4], %s906
          %s908 = sand.u32 %s185, 1
          %s909 = smul.addr %s908, 128
          %s910 = scalar_lea.vmem [#allocation5], %s909
          %911 = dma.done %s907, 2048
        $region64: #{tpu_custom_call.1} parent=59 // pred_fallthru
          _
      $region60: #{tpu_custom_call.1} parent=5 // pred_fallthru
        _
    $region6: #{tpu_custom_call.1} parent=1 // loop_footer
      %s23 = sadd.s32 1, %s19
    $region7: #{tpu_custom_call.1} parent=1 // loop_footer_branch
      %18 = sbr.rel target = $region3
    $region8: #{tpu_custom_call.1} parent=1 // loop_exit
      _
    %912 = vsyncpa [#allocation3], 1
    %s913 = scalar_lea.sflag [#allocation3], 1
    %914 = vsyncpa %s913, 1
    %915 = vsyncpa [#allocation4], 1
    %s916 = scalar_lea.sflag [#allocation4], 1
    %917 = vsyncpa %s916, 1

</llo_original>
